<compile_context>
chip_gen: v6e
topology: v6e:2x2x1
jax: 0.10.0
libtpu: 0.0.40
codegen_flags: <defaults>
</compile_context>

<pallas_src>
import functools

import numpy as np
import jax
import jax.numpy as jnp
from jax.experimental import pallas as pl
from jax.experimental.pallas import tpu as pltpu


def _round_up(x, m):
    return ((x + m - 1) // m) * m


def _shuffle_kernel(x_ref, p_ref, out_ref, *, precision):
    # out[b, j] = sum_k x[b, k] * P[k, j], P one-hot  =>  out[b, j] = x[b, perm[j]]
    #   bf16 inputs: DEFAULT (one MXU pass) is exact: 0/1 multipliers, f32 acc.
    #   f32  inputs: HIGHEST keeps the contraction bit-exact for normal values.
    out_ref[...] = jnp.dot(
        x_ref[...],
        p_ref[...],
        precision=precision,
        preferred_element_type=jnp.float32,
    ).astype(out_ref.dtype)


class Shuffle:
    """JAX/Pallas port of hw3/flow/realnvp.py::Shuffle."""

    def __init__(self, num_inputs, seed=0, block_rows=1024):
        # deterministic permutation (synthetic init, no checkpoint load)
        rng = np.random.RandomState(seed)
        self.num_inputs = int(num_inputs)
        perm = rng.permutation(self.num_inputs).astype(np.int32)
        inv_perm = np.argsort(perm).astype(np.int32)
        self.perm = jnp.asarray(perm)
        self.inv_perm = jnp.asarray(inv_perm)

        # One-hot permutation matrices, precomputed once per supported dtype
        # (no per-call casts / extra d x d HBM round-trips).
        # P[k, j] = 1 iff perm[j] == k  =>  (x @ P)[:, j] == x[:, perm[j]]
        eye = np.eye(self.num_inputs, dtype=np.float32)
        p_direct, p_inverse = eye[:, perm], eye[:, inv_perm]
        self._p_mats = {
            ("direct", jnp.dtype(jnp.float32)): jnp.asarray(p_direct, jnp.float32),
            ("inverse", jnp.dtype(jnp.float32)): jnp.asarray(p_inverse, jnp.float32),
            ("direct", jnp.dtype(jnp.bfloat16)): jnp.asarray(p_direct, jnp.bfloat16),
            ("inverse", jnp.dtype(jnp.bfloat16)): jnp.asarray(p_inverse, jnp.bfloat16),
        }

        # Max batch-tile rows.  Default 1024 (multiple of 256 for the MXU M dim);
        # per-grid-step overhead (~0.35us) favors the biggest tile that fits VMEM.
        self.block_rows = max(8, _round_up(int(block_rows), 8))

        # Generation-aware VMEM budget (~70% of per-core capacity):
        #   v5e/v6e ~128 MiB -> ~90 MiB usable; v7x 64 MiB/TC -> ~45 MiB.
        # On v7x the batch axis is sharded across 2 TCs, so P is duplicated per
        # TC; the per-TC capacity reported here already reflects that.
        try:
            cap = int(pltpu.get_tpu_info().vmem_capacity_bytes)
        except Exception:
            cap = 64 << 20  # conservative default (v7x per-TC VMEM)
        self._vmem_capacity = cap
        self._vmem_budget = int(0.7 * cap)

    # -- helpers ------------------------------------------------------------
    def _p_block_spec(self, d):
        """Resident P spec: constant index_map + single pipeline buffer."""
        idx = lambda i: (0, 0)
        try:
            # Block never changes -> a second pipeline buffer is pure VMEM waste.
            return pl.BlockSpec((d, d), idx, pipeline_mode=pl.Buffered(1)), 1
        except (TypeError, ValueError, AttributeError):
            # Older API without pipeline_mode/Buffered(1): default double buffer.
            return pl.BlockSpec((d, d), idx), 2

    def _vmem_limit(self, vmem_est):
        # Leave headroom below physical capacity for compiler-internal scratch
        # (matters most on v7x's 64 MiB per-TC VMEM).
        cap = int(0.85 * self._vmem_capacity)
        return int(min(max(vmem_est, 16 << 20), cap))

    def _pick_tm(self, bsz_p, d, itemsize, p_resident, budget):
        # x/out tiles are double-buffered by the pipeline (2 bufs each).
        tm = self.block_rows
        while tm > 8 and p_resident + 4 * tm * d * itemsize > budget:
            tm = max(8, _round_up(tm // 2, 8))
        return max(8, min(tm, bsz_p))

    def _pick_col_tiles(self, bsz_p, d, itemsize, budget):
        # Column-tiled path: keep a (d, tn) slab of P streamed/double-buffered,
        # an (tm, d) x tile resident across the column axis, (tm, tn) out tiles.
        for tn in (512, 256, 128):
            if d % tn != 0:
                continue
            cost = lambda tm: (2 * tm * d + 2 * d * tn + 2 * tm * tn) * itemsize
            tm = self.block_rows
            while tm > 8 and cost(tm) > budget:
                tm = max(8, _round_up(tm // 2, 8))
            if cost(tm) <= budget:
                return max(8, min(tm, bsz_p)), tn
        return None

    @staticmethod
    def _split_for_megacore(bsz_p, tm):
        # Guarantee >= 2 grid steps along the batch ("parallel") axis so both
        # v7x TensorCores get work; extra step overhead (~0.35us) is negligible
        # on v5e/v6e (1 TC).
        if bsz_p > 8:
            half = max(8, (bsz_p // 2) // 8 * 8)
            tm = min(tm, half)
        return max(8, min(tm, bsz_p))

    # -- forward ------------------------------------------------------------
    def __call__(self, inputs, mode="direct", *, _force_col_tiled=False):
        assert mode in ("direct", "inverse")
        bsz, d = inputs.shape
        assert d == self.num_inputs
        perm = self.perm if mode == "direct" else self.inv_perm
        # log|det| of a permutation is 0; produced in the wrapper (keeping a
        # lane-width-1 constant output in the kernel would force masked stores).
        logdet = jnp.zeros((bsz, 1), dtype=jnp.float32)

        dtype = jnp.dtype(inputs.dtype)
        # Fast path: tiny / lane-unaligned feature dim, or a dtype for which the
        # one-hot matmul is not guaranteed bit-exact -> pure bandwidth gather.
        if d < 128 or d % 128 != 0 or dtype not in (
            jnp.dtype(jnp.float32),
            jnp.dtype(jnp.bfloat16),
        ):
            return inputs[:, perm], logdet

        P = self._p_mats[(mode, dtype)]
        itemsize = dtype.itemsize
        # Dtype-dependent MXU precision (see module docstring).
        precision = (
            jax.lax.Precision.DEFAULT
            if dtype == jnp.dtype(jnp.bfloat16)
            else jax.lax.Precision.HIGHEST
        )
        kernel = functools.partial(_shuffle_kernel, precision=precision)

        budget = self._vmem_budget
        p_spec, p_bufs = self._p_block_spec(d)
        p_resident = p_bufs * d * d * itemsize
        bsz_p = _round_up(bsz, 8)

        # ---- resident-P path ------------------------------------------------
        if not _force_col_tiled and p_resident + 4 * 8 * d * itemsize <= budget:
            tm = self._pick_tm(bsz_p, d, itemsize, p_resident, budget)
            tm = self._split_for_megacore(bsz_p, tm)
            bsz_p = _round_up(bsz_p, tm)
            x = inputs if bsz_p == bsz else jnp.pad(inputs, ((0, bsz_p - bsz), (0, 0)))
            vmem_limit = self._vmem_limit(p_resident + 4 * tm * d * itemsize + (2 << 20))

            out = pl.pallas_call(
                kernel,
                out_shape=jax.ShapeDtypeStruct((bsz_p, d), inputs.dtype),
                grid=(bsz_p // tm,),
                in_specs=[
                    pl.BlockSpec((tm, d), lambda i: (i, 0)),  # streamed batch tiles
                    p_spec,                                   # resident permutation matrix
                ],
                out_specs=pl.BlockSpec((tm, d), lambda i: (i, 0)),
                compiler_params=pltpu.CompilerParams(
                    dimension_semantics=("parallel",),
                    vmem_limit_bytes=vmem_limit,
                ),
            )(x, P)
            return (out[:bsz] if bsz_p != bsz else out), logdet

        # ---- column-tiled path (P too large to keep resident) ----------------
        tiles = self._pick_col_tiles(bsz_p, d, itemsize, budget)
        if tiles is None:
            # Not even a (d, 128) slab of P fits -> pure bandwidth gather in XLA.
            return inputs[:, perm], logdet
        tm, tn = tiles
        tm = self._split_for_megacore(bsz_p, tm)
        bsz_p = _round_up(bsz_p, tm)
        x = inputs if bsz_p == bsz else jnp.pad(inputs, ((0, bsz_p - bsz), (0, 0)))
        vmem_limit = self._vmem_limit(
            (2 * tm * d + 2 * d * tn + 2 * tm * tn) * itemsize + (2 << 20)
        )

        out = pl.pallas_call(
            kernel,
            out_shape=jax.ShapeDtypeStruct((bsz_p, d), inputs.dtype),
            grid=(bsz_p // tm, d // tn),
            in_specs=[
                pl.BlockSpec((tm, d), lambda i, j: (i, 0)),  # x tile, constant in j
                pl.BlockSpec((d, tn), lambda i, j: (0, j)),  # streamed P column slab
            ],
            out_specs=pl.BlockSpec((tm, tn), lambda i, j: (i, j)),
            compiler_params=pltpu.CompilerParams(
                dimension_semantics=("parallel", "arbitrary"),
                vmem_limit_bytes=vmem_limit,
            ),
        )(x, P)
        return (out[:bsz] if bsz_p != bsz else out), logdet


if __name__ == "__main__":
    bsz, num_inputs = 64, 128
    key = jax.random.PRNGKey(0)
    x = jax.random.normal(key, (bsz, num_inputs), dtype=jnp.float32)

    # small block_rows so the demo exercises a multi-step (pipelined) grid
    layer = Shuffle(num_inputs, seed=0, block_rows=16)

    # f32 direct pass (HIGHEST precision, resident-P path)
    y, logdet = layer(x, mode="direct")
    y = jax.block_until_ready(y)
    logdet = jax.block_until_ready(logdet)
    y_ref = x[:, layer.perm]
    assert y.shape == (bsz, num_inputs)
    assert logdet.shape == (bsz, 1)
    np.testing.assert_array_equal(np.asarray(y), np.asarray(y_ref))
    np.testing.assert_array_equal(np.asarray(logdet), np.zeros((bsz, 1), np.float32))

    # inverse pass undoes direct pass
    x_back, logdet2 = layer(y, mode="inverse")
    x_back = jax.block_until_ready(x_back)
    np.testing.assert_array_equal(np.asarray(x_back), np.asarray(x))
    np.testing.assert_array_equal(np.asarray(logdet2), np.zeros((bsz, 1), np.float32))

    # bf16 pass (DEFAULT precision, single MXU pass) is still bit-exact
    x_bf = x.astype(jnp.bfloat16)
    y_bf, _ = layer(x_bf, mode="direct")
    y_bf = jax.block_until_ready(y_bf)
    np.testing.assert_array_equal(
        np.asarray(y_bf.astype(jnp.float32)),
        np.asarray(x_bf[:, layer.perm].astype(jnp.float32)),
    )

    # ragged batch exercises the pad/slice (and >=2-grid-step) path
    x_odd = jax.random.normal(jax.random.PRNGKey(1), (10, num_inputs), dtype=jnp.float32)
    y_odd, logdet_odd = layer(x_odd, mode="direct")
    y_odd = jax.block_until_ready(y_odd)
    np.testing.assert_array_equal(np.asarray(y_odd), np.asarray(x_odd[:, layer.perm]))
    assert logdet_odd.shape == (10, 1)

    # column-tiled path (used when P is too big to stay resident), forced at small scale
    layer_col = Shuffle(384, seed=1, block_rows=16)
    x_col = jax.random.normal(jax.random.PRNGKey(2), (24, 384), dtype=jnp.float32)
    y_col, ld_col = layer_col(x_col, mode="direct", _force_col_tiled=True)
    y_col = jax.block_until_ready(y_col)
    np.testing.assert_array_equal(np.asarray(y_col), np.asarray(x_col[:, layer_col.perm]))
    assert ld_col.shape == (24, 1)

    # lane-unaligned feature dim falls back to the XLA gather
    layer_small = Shuffle(20, seed=2)
    x_small = jax.random.normal(jax.random.PRNGKey(3), (4, 20), dtype=jnp.float32)
    y_small, ld_small = layer_small(x_small, mode="direct")
    y_small = jax.block_until_ready(y_small)
    np.testing.assert_array_equal(np.asarray(y_small), np.asarray(x_small[:, layer_small.perm]))
    assert ld_small.shape == (4, 1)

    print("KERNEL_OK")
</pallas_src>

<mosaic_0001>
module attributes {stable_mosaic.version = 11 : i64} {
  func.func @_shuffle_kernel(%arg0: i32, %arg1: memref<16x128xf32, #tpu.memory_space<vmem>>, %arg2: memref<128x128xf32, #tpu.memory_space<vmem>>, %arg3: memref<16x128xf32, #tpu.memory_space<vmem>>) attributes {dimension_semantics = [#tpu.dimension_semantics<parallel>], iteration_bounds = array<i64: 4>, scalar_prefetch = 0 : i64, scratch_operands = 0 : i64, tpu.core_type = #tpu.core_type<tc>, window_params = [{transform_indices = @transform_0, window_bounds = array<i64: 16, 128>}, {pipeline_mode = #tpu.pipeline_mode<synchronous>, transform_indices = @transform_1, window_bounds = array<i64: 128, 128>}, {transform_indices = @transform_2, window_bounds = array<i64: 16, 128>}]} {
    %c0 = arith.constant 0 : index
    %c0_0 = arith.constant 0 : index
    %0 = vector.load %arg1[%c0, %c0_0] : memref<16x128xf32, #tpu.memory_space<vmem>>, vector<16x128xf32>
    %c0_1 = arith.constant 0 : index
    %c0_2 = arith.constant 0 : index
    %1 = vector.load %arg2[%c0_1, %c0_2] : memref<128x128xf32, #tpu.memory_space<vmem>>, vector<128x128xf32>
    %cst = arith.constant dense<0.000000e+00> : vector<16x128xf32>
    %2 = tpu.matmul %0, %1, %cst {dimension_numbers = #tpu.dot_dimension_numbers<[1], [0], [0], [1], [0, 0, 1, 1], [], []>, precision = #tpu.contract_precision<fp32>} : vector<16x128xf32>, vector<128x128xf32>, vector<16x128xf32> -> vector<16x128xf32>
    %c0_3 = arith.constant 0 : index
    %c0_4 = arith.constant 0 : index
    %3 = vector.load %arg3[%c0_3, %c0_4] : memref<16x128xf32, #tpu.memory_space<vmem>>, vector<16x128xf32>
    tpu.vector_store %arg3[%c0_3, %c0_4], %2 {strides = array<i32>} : memref<16x128xf32, #tpu.memory_space<vmem>>, vector<16x128xf32>,
    return
  }
  func.func @transform_0(%arg0: i32) -> (i32, i32) {
    %c0_i32 = arith.constant 0 : i32
    %c0_i32_0 = arith.constant 0 : i32
    return %arg0, %c0_i32 : i32, i32
  }
  func.func @transform_1(%arg0: i32) -> (i32, i32) {
    %c0_i32 = arith.constant 0 : i32
    %c0_i32_0 = arith.constant 0 : i32
    %c0_i32_1 = arith.constant 0 : i32
    return %c0_i32, %c0_i32_0 : i32, i32
  }
  func.func @transform_2(%arg0: i32) -> (i32, i32) {
    %c0_i32 = arith.constant 0 : i32
    %c0_i32_0 = arith.constant 0 : i32
    return %arg0, %c0_i32 : i32, i32
  }
}

</mosaic_0001>

<llo_original>
// kernel: tpu_custom_call.1
$region0: #{tpu_custom_call.1}
  #allocation0 [shape = 'u32[]', space=smem, size = 0x4, offset = 0x4, fixed_abs, tag = 'smem constant byte address 0x4 - core index']
  #allocation1 [shape = 'u32[144,128]{1,0:T(1,128)}', space=vmem, size = 0x12000, scoped, tag = 'internal scratch']
  %s0 = inlined_call_operand.hbm [shape: f32[64,128], index: 0, kind: input, shape index: {}]
  %s1 = inlined_call_operand.hbm [shape: f32[128,128], index: 1, kind: input, shape index: {}]
  %s2 = inlined_call_operand.hbm [shape: f32[64,128], index: 2, kind: output, shape index: {}]
  %s3 = sld [smem:[#allocation0]]
  $region49: #{tpu_custom_call.1} parent=0
    _
  %s5 = ssub.s32 1, %s3
  %s6 = scalar_select 0, %s5, %s3
  $region1: #{tpu_custom_call.1} parent=0
    #allocation2 [shape = 'u8[16384]{0}', space=vmem, size = 0x4000, scoped, tag = 'input window, operand 0']
    #allocation3 [shape = 's32[2]{0}', space=sflag, size = 0x8, scoped, tag = 'scoped memory for tpu_custom_call.1']
    #allocation4 [shape = 's32[2]{0}', space=sflag, size = 0x8, scoped, tag = 'scoped memory for tpu_custom_call.1']
    #allocation5 [shape = 'u8[65536]{0}', space=vmem, size = 0x10000, scoped, tag = 'input window, operand 1, single buffered']
    #allocation6 [shape = 's32[1]{0}', space=sflag, size = 0x4, scoped, tag = 'scoped memory for tpu_custom_call.1']
    #allocation7 [shape = 'u8[16384]{0}', space=vmem, size = 0x4000, scoped, tag = 'output window, operand 0']
    %7 = vsyncpa [#allocation3], 0
    %s8 = scalar_lea.sflag [#allocation3], 1
    %9 = vsyncpa %s8, 0
    %10 = vsyncpa [#allocation6], 0
    %11 = vsyncpa [#allocation4], 0
    %s12 = scalar_lea.sflag [#allocation4], 1
    %13 = vsyncpa %s12, 0
    loop: start=0, step=1, limit=6
    $region2: #{tpu_custom_call.1} parent=1 // loop_pre_header
      _
    $region3: #{tpu_custom_call.1} parent=1 // loop_header
      %s15 = sphi 0, %s19
      %p16 = scmp.ge.s32.totalorder %s15, 6
      %s25 = sphi 0, %s27
      %s28 = sphi 0, %s25
      %s29 = sphi 0, %s28
      %s45 = sphi 0, %s29
      %s49 = sphi 0, %s49
      %s51 = sphi 0, %s49
      %s52 = sphi 0, %s51
      %s66 = sphi 0, %s52
      %s72 = sphi 0, %s74
      %s75 = sphi 0, %s72
      %s76 = sphi 0, %s75
      %s92 = sphi 0, %s76
    $region4: #{tpu_custom_call.1} parent=1 // loop_header_branch
      %18 = sbr.rel (%p16) target = $region8
    $region5: #{tpu_custom_call.1} parent=1 // loop_body
      %s20 = ssub.s32 %s15, 1
      %s21 = ssub.s32 %s15, 2
      %s22 = sadd.s32 %s15, 1
      %s23 = ssub.s32 %s15, %s22
      %p24 = scmp.eq.s32.totalorder %s23, 0
      %s26 = sadd.s32 %s25, 1
      %s27 = scalar_select %p24, %s25, %s26
      %p30 = pneg %p24
      %p31 = scmp.eq.s32.totalorder %s15, 3
      %p32 = por %p30, %p31
      %p33 = scmp.ne.s32.totalorder %s25, %s28
      %p34 = scmp.eq.s32.totalorder %s15, 0
      %p35 = por %p33, %p34
      %p36 = scmp.ne.s32.totalorder %s25, %s28
      %p37 = scmp.eq.s32.totalorder %s20, 3
      %p38 = por %p36, %p37
      %p39 = scmp.ne.s32.totalorder %s28, %s29
      %p40 = scmp.eq.s32.totalorder %s20, 0
      %p41 = por %p39, %p40
      %p42 = scmp.ne.s32.totalorder %s28, %s29
      %p43 = scmp.eq.s32.totalorder %s21, 3
      %p44 = por %p42, %p43
      %p46 = scmp.ne.s32.totalorder %s29, %s45
      %p47 = scmp.eq.s32.totalorder %s21, 0
      %p48 = por %p46, %p47
      %s50 = sadd.s32 %s49, 1
      %p53 = scmp.eq.s32.totalorder %s15, 3
      %p54 = scmp.ne.s32.totalorder %s49, %s51
      %p55 = scmp.eq.s32.totalorder %s15, 0
      %p56 = por %p54, %p55
      %p57 = scmp.ne.s32.totalorder %s49, %s51
      %p58 = scmp.eq.s32.totalorder %s20, 3
      %p59 = por %p57, %p58
      %p60 = scmp.ne.s32.totalorder %s51, %s52
      %p61 = scmp.eq.s32.totalorder %s20, 0
      %p62 = por %p60, %p61
      %p63 = scmp.ne.s32.totalorder %s51, %s52
      %p64 = scmp.eq.s32.totalorder %s21, 3
      %p65 = por %p63, %p64
      %p67 = scmp.ne.s32.totalorder %s52, %s66
      %p68 = scmp.eq.s32.totalorder %s21, 0
      %p69 = por %p67, %p68
      %s70 = ssub.s32 %s15, %s22
      %p71 = scmp.eq.s32.totalorder %s70, 0
      %s73 = sadd.s32 %s72, 1
      %s74 = scalar_select %p71, %s72, %s73
      %p77 = pneg %p71
      %p78 = scmp.eq.s32.totalorder %s15, 3
      %p79 = por %p77, %p78
      %p80 = scmp.ne.s32.totalorder %s72, %s75
      %p81 = scmp.eq.s32.totalorder %s15, 0
      %p82 = por %p80, %p81
      %p83 = scmp.ne.s32.totalorder %s72, %s75
      %p84 = scmp.eq.s32.totalorder %s20, 3
      %p85 = por %p83, %p84
      %p86 = scmp.ne.s32.totalorder %s75, %s76
      %p87 = scmp.eq.s32.totalorder %s20, 0
      %p88 = por %p86, %p87
      %p89 = scmp.ne.s32.totalorder %s75, %s76
      %p90 = scmp.eq.s32.totalorder %s21, 3
      %p91 = por %p89, %p90
      %p93 = scmp.ne.s32.totalorder %s76, %s92
      %p94 = scmp.eq.s32.totalorder %s21, 0
      %p95 = por %p93, %p94
      %p96 = scmp.le.s32.totalorder 1, %s15
      %p97 = scmp.lt.s32.totalorder %s15, 5
      %p98 = pnand %p96, %p97
      %p99 = pneg %p98
      // Predicated region
      $region9: #{tpu_custom_call.1} parent=5 // pred_check
        _
      $region10: #{tpu_custom_call.1} parent=5 // pred_check_branch
        %101 = sbr.rel (%p98) target = $region12
      $region11: #{tpu_custom_call.1} parent=5 // pred_region
        %s102 = ssub.s32 %s15, 1
        // Predicated region
        $region13: #{tpu_custom_call.1} parent=11 // pred_check
          %p103 = pneg %p62
        $region14: #{tpu_custom_call.1} parent=11 // pred_check_branch
          %105 = sbr.rel (%p103) target = $region16
        $region15: #{tpu_custom_call.1} parent=11 // pred_region
          %s107 = ssub.s32 2048, 2048
          %108 = vsyncadd [#allocation6], %s107
          %s109 = sshll.u32 [#allocation5], 4
          %s110 = int_to_ptr.vmem [resolvable:$true] %s109
          %115 = dma.hbm_to_vmem [thread:$0]  %s1, 2048, %s110, [#allocation6], 128, 128, 8
        $region16: #{tpu_custom_call.1} parent=11 // pred_fallthru
          _
      $region12: #{tpu_custom_call.1} parent=5 // pred_fallthru
        _
      %p116 = scmp.lt.s32.totalorder %s15, 4
      // Predicated region
      $region17: #{tpu_custom_call.1} parent=5 // pred_check
        %p117 = pneg %p116
      $region18: #{tpu_custom_call.1} parent=5 // pred_check_branch
        %119 = sbr.rel (%p117) target = $region20
      $region19: #{tpu_custom_call.1} parent=5 // pred_region
        // Predicated region
        $region21: #{tpu_custom_call.1} parent=19 // pred_check
          %p120 = pneg %p35
        $region22: #{tpu_custom_call.1} parent=19 // pred_check_branch
          %122 = sbr.rel (%p120) target = $region24
        $region23: #{tpu_custom_call.1} parent=19 // pred_region
          %s123 = sand.u32 %s25, 1
          %s124 = scalar_lea.sflag [#allocation3], %s123
          %s125 = sand.u32 %s25, 1
          %s126 = smul.addr %s125, 16
          %s127 = scalar_lea.vmem [#allocation2], %s126
          %s128 = smul.u32 2, %s15
          %s130 = ssub.s32 256, 256
          %131 = vsyncadd %s124, %s130
          %s132 = smul.addr %s128, 128
          %s133 = scalar_lea.hbm %s0, %s132
          %s134 = sshll.u32 %s127, 4
          %s135 = int_to_ptr.vmem [resolvable:$true] %s134
          %140 = dma.hbm_to_vmem [thread:$0]  %s133, 256, %s135, %s124, 128, 128, 8
        $region24: #{tpu_custom_call.1} parent=19 // pred_fallthru
          _
      $region20: #{tpu_custom_call.1} parent=5 // pred_fallthru
        _
      %p141 = scmp.le.s32.totalorder 1, %s15
      %p142 = scmp.lt.s32.totalorder %s15, 5
      %p143 = pnand %p141, %p142
      %p144 = pneg %p143
      // Predicated region
      $region25: #{tpu_custom_call.1} parent=5 // pred_check
        _
      $region26: #{tpu_custom_call.1} parent=5 // pred_check_branch
        %146 = sbr.rel (%p143) target = $region28
      $region27: #{tpu_custom_call.1} parent=5 // pred_region
        %s147 = ssub.s32 %s15, 1
        %s148 = sand.u32 %s28, 1
        %s149 = scalar_lea.sflag [#allocation3], %s148
        %s150 = sand.u32 %s28, 1
        %s151 = smul.addr %s150, 16
        %s152 = scalar_lea.vmem [#allocation2], %s151
        // Predicated region
        $region29: #{tpu_custom_call.1} parent=27 // pred_check
          %p153 = pneg %p41
        $region30: #{tpu_custom_call.1} parent=27 // pred_check_branch
          %155 = sbr.rel (%p153) target = $region32
        $region31: #{tpu_custom_call.1} parent=27 // pred_region
          %156 = dma.done %s149, 256
        $region32: #{tpu_custom_call.1} parent=27 // pred_fallthru
          _
        // Predicated region
        $region33: #{tpu_custom_call.1} parent=27 // pred_check
          %p157 = pneg %p62
        $region34: #{tpu_custom_call.1} parent=27 // pred_check_branch
          %159 = sbr.rel (%p157) target = $region36
        $region35: #{tpu_custom_call.1} parent=27 // pred_region
          %160 = dma.done [#allocation6], 2048
        $region36: #{tpu_custom_call.1} parent=27 // pred_fallthru
          _
        %s161 = sand.u32 %s28, 1
        %s162 = scalar_lea.sflag [#allocation3], %s161
        %s163 = sand.u32 %s28, 1
        %s164 = smul.addr %s163, 16
        %s165 = scalar_lea.vmem [#allocation2], %s164
        %p166 = pneg %p41
        %p167 = pneg %p38
        %p168 = pneg %p62
        %p169 = pneg %p59
        %p170 = pneg %p88
        %p171 = pneg %p85
        %s172 = sand.u32 %s75, 1
        %s173 = scalar_lea.sflag [#allocation4], %s172
        %s174 = sand.u32 %s75, 1
        %s175 = smul.addr %s174, 16
        %s176 = scalar_lea.vmem [#allocation7], %s175
        %s177 = smul.u32 2, %s20
        %s178 = smul.u32 2, %s20
        %v179 = vld [vmem:[%s152] sm:$0xff]
        %v180 = vld [vmem:[%s152 + $0x8] sm:$0xff]
        %v181 = vld [vmem:[#allocation5] sm:$0xff]
        %v182 = vld [vmem:[#allocation5 + $0x8] sm:$0xff]
        %v183 = vld [vmem:[#allocation5 + $0x10] sm:$0xff]
        %v184 = vld [vmem:[#allocation5 + $0x18] sm:$0xff]
        %v185 = vld [vmem:[#allocation5 + $0x20] sm:$0xff]
        %v186 = vld [vmem:[#allocation5 + $0x28] sm:$0xff]
        %v187 = vld [vmem:[#allocation5 + $0x30] sm:$0xff]
        %v188 = vld [vmem:[#allocation5 + $0x38] sm:$0xff]
        %v189 = vld [vmem:[#allocation5 + $0x40] sm:$0xff]
        %v190 = vld [vmem:[#allocation5 + $0x48] sm:$0xff]
        %v191 = vld [vmem:[#allocation5 + $0x50] sm:$0xff]
        %v192 = vld [vmem:[#allocation5 + $0x58] sm:$0xff]
        %v193 = vld [vmem:[#allocation5 + $0x60] sm:$0xff]
        %v194 = vld [vmem:[#allocation5 + $0x68] sm:$0xff]
        %v195 = vld [vmem:[#allocation5 + $0x70] sm:$0xff]
        %v196 = vld [vmem:[#allocation5 + $0x78] sm:$0xff]
        %197 = vmatprep.subr.mxu0 0.0
        %v198 = vand.u32 %v196, 4294901760
        %199 = vmatpush1.msra.mxu0 %v198
        %200 = vmatprep.subr.mxu0 0.0
        %v201 = vand.u32 %v195, 4294901760
        %202 = vmatpush1.msra.mxu0 %v201
        %203 = vmatprep.subr.mxu0 0.0
        %v204 = vand.u32 %v194, 4294901760
        %205 = vmatpush1.msra.mxu0 %v204
        %206 = vmatprep.subr.mxu0 0.0
        %v207 = vand.u32 %v193, 4294901760
        %208 = vmatpush1.msra.mxu0 %v207
        %209 = vmatprep.subr.mxu0 0.0
        %v210 = vand.u32 %v192, 4294901760
        %211 = vmatpush1.msra.mxu0 %v210
        %212 = vmatprep.subr.mxu0 0.0
        %v213 = vand.u32 %v191, 4294901760
        %214 = vmatpush1.msra.mxu0 %v213
        %215 = vmatprep.subr.mxu0 0.0
        %v216 = vand.u32 %v190, 4294901760
        %217 = vmatpush1.msra.mxu0 %v216
        %218 = vmatprep.subr.mxu0 0.0
        %v219 = vand.u32 %v189, 4294901760
        %220 = vmatpush1.msra.mxu0 %v219
        %221 = vmatprep.subr.mxu0 0.0
        %v222 = vand.u32 %v188, 4294901760
        %223 = vmatpush1.msra.mxu0 %v222
        %224 = vmatprep.subr.mxu0 0.0
        %v225 = vand.u32 %v187, 4294901760
        %226 = vmatpush1.msra.mxu0 %v225
        %227 = vmatprep.subr.mxu0 0.0
        %v228 = vand.u32 %v186, 4294901760
        %229 = vmatpush1.msra.mxu0 %v228
        %230 = vmatprep.subr.mxu0 0.0
        %v231 = vand.u32 %v185, 4294901760
        %232 = vmatpush1.msra.mxu0 %v231
        %233 = vmatprep.subr.mxu0 0.0
        %v234 = vand.u32 %v184, 4294901760
        %235 = vmatpush1.msra.mxu0 %v234
        %236 = vmatprep.subr.mxu0 0.0
        %v237 = vand.u32 %v183, 4294901760
        %238 = vmatpush1.msra.mxu0 %v237
        %239 = vmatprep.subr.mxu0 0.0
        %v240 = vand.u32 %v182, 4294901760
        %241 = vmatpush1.msra.mxu0 %v240
        %242 = vmatprep.subr.mxu0 0.0
        %v243 = vand.u32 %v181, 4294901760
        %244 = vmatpush1.msra.mxu0 %v243
        %245 = vmatprep.subr.mxu0 0.0
        %246 = vmatpush2.msra.mxu0 0.0
        %247 = vmatprep.subr.mxu0 0.0
        %248 = vmatpush2.msra.mxu0 0.0
        %249 = vmatprep.subr.mxu0 0.0
        %250 = vmatpush2.msra.mxu0 0.0
        %251 = vmatprep.subr.mxu0 0.0
        %252 = vmatpush2.msra.mxu0 0.0
        %253 = vmatprep.subr.mxu0 0.0
        %254 = vmatpush2.msra.mxu0 0.0
        %255 = vmatprep.subr.mxu0 0.0
        %256 = vmatpush2.msra.mxu0 0.0
        %257 = vmatprep.subr.mxu0 0.0
        %258 = vmatpush2.msra.mxu0 0.0
        %259 = vmatprep.subr.mxu0 0.0
        %260 = vmatpush2.msra.mxu0 0.0
        %261 = vmatprep.subr.mxu0 0.0
        %262 = vmatpush2.msra.mxu0 0.0
        %263 = vmatprep.subr.mxu0 0.0
        %264 = vmatpush2.msra.mxu0 0.0
        %265 = vmatprep.subr.mxu0 0.0
        %266 = vmatpush2.msra.mxu0 0.0
        %267 = vmatprep.subr.mxu0 0.0
        %268 = vmatpush2.msra.mxu0 0.0
        %269 = vmatprep.subr.mxu0 0.0
        %270 = vmatpush2.msra.mxu0 0.0
        %271 = vmatprep.subr.mxu0 0.0
        %272 = vmatpush2.msra.mxu0 0.0
        %273 = vmatprep.subr.mxu0 0.0
        %274 = vmatpush2.msra.mxu0 0.0
        %275 = vmatprep.subr.mxu0 0.0
        %276 = vmatpush2.msra.mxu0 0.0
        %277 = vmatprep.mubr.f32.mxu0 0.0
        %v278 = vand.u32 %v179, 4294901760
        %v279 = vsub.f32 %v179, %v278
        %v280 = vand.u32 %v279, 4294901760
        %v281 = vsub.f32 %v279, %v280
        %v282 = vand.u32 %v281, 4294901760
        %283 = vmatmul.mubr.f32.gmra.mxu0 %v282
        %v284 = vpop.f32.mrf.mxu0
        %v285 = vadd.f32 0.0, %v284
        %v286 = vpop.f32.mrf.mxu0
        %287 = vmatprep.mubr.f32.mxu0 0.0
        %v288 = vand.u32 %v180, 4294901760
        %v289 = vsub.f32 %v180, %v288
        %v290 = vand.u32 %v289, 4294901760
        %v291 = vsub.f32 %v289, %v290
        %v292 = vand.u32 %v291, 4294901760
        %293 = vmatmul.mubr.f32.gmra.mxu0 %v292
        %v294 = vpop.f32.mrf.mxu0
        %v295 = vadd.f32 0.0, %v294
        %v296 = vpop.f32.mrf.mxu0
        %297 = vdwg.mxu0
        %298 = vmatprep.subr.mxu0 0.0
        %v299 = vand.u32 %v196, 4294901760
        %v300 = vsub.f32 %v196, %v299
        %v301 = vand.u32 %v300, 4294901760
        %v302 = vsub.f32 %v300, %v301
        %v303 = vand.u32 %v302, 4294901760
        %304 = vmatpush1.msra.mxu0 %v303
        %305 = vmatprep.subr.mxu0 0.0
        %v306 = vand.u32 %v195, 4294901760
        %v307 = vsub.f32 %v195, %v306
        %v308 = vand.u32 %v307, 4294901760
        %v309 = vsub.f32 %v307, %v308
        %v310 = vand.u32 %v309, 4294901760
        %311 = vmatpush1.msra.mxu0 %v310
        %312 = vmatprep.subr.mxu0 0.0
        %v313 = vand.u32 %v194, 4294901760
        %v314 = vsub.f32 %v194, %v313
        %v315 = vand.u32 %v314, 4294901760
        %v316 = vsub.f32 %v314, %v315
        %v317 = vand.u32 %v316, 4294901760
        %318 = vmatpush1.msra.mxu0 %v317
        %319 = vmatprep.subr.mxu0 0.0
        %v320 = vand.u32 %v193, 4294901760
        %v321 = vsub.f32 %v193, %v320
        %v322 = vand.u32 %v321, 4294901760
        %v323 = vsub.f32 %v321, %v322
        %v324 = vand.u32 %v323, 4294901760
        %325 = vmatpush1.msra.mxu0 %v324
        %326 = vmatprep.subr.mxu0 0.0
        %v327 = vand.u32 %v192, 4294901760
        %v328 = vsub.f32 %v192, %v327
        %v329 = vand.u32 %v328, 4294901760
        %v330 = vsub.f32 %v328, %v329
        %v331 = vand.u32 %v330, 4294901760
        %332 = vmatpush1.msra.mxu0 %v331
        %333 = vmatprep.subr.mxu0 0.0
        %v334 = vand.u32 %v191, 4294901760
        %v335 = vsub.f32 %v191, %v334
        %v336 = vand.u32 %v335, 4294901760
        %v337 = vsub.f32 %v335, %v336
        %v338 = vand.u32 %v337, 4294901760
        %339 = vmatpush1.msra.mxu0 %v338
        %340 = vmatprep.subr.mxu0 0.0
        %v341 = vand.u32 %v190, 4294901760
        %v342 = vsub.f32 %v190, %v341
        %v343 = vand.u32 %v342, 4294901760
        %v344 = vsub.f32 %v342, %v343
        %v345 = vand.u32 %v344, 4294901760
        %346 = vmatpush1.msra.mxu0 %v345
        %347 = vmatprep.subr.mxu0 0.0
        %v348 = vand.u32 %v189, 4294901760
        %v349 = vsub.f32 %v189, %v348
        %v350 = vand.u32 %v349, 4294901760
        %v351 = vsub.f32 %v349, %v350
        %v352 = vand.u32 %v351, 4294901760
        %353 = vmatpush1.msra.mxu0 %v352
        %354 = vmatprep.subr.mxu0 0.0
        %v355 = vand.u32 %v188, 4294901760
        %v356 = vsub.f32 %v188, %v355
        %v357 = vand.u32 %v356, 4294901760
        %v358 = vsub.f32 %v356, %v357
        %v359 = vand.u32 %v358, 4294901760
        %360 = vmatpush1.msra.mxu0 %v359
        %361 = vmatprep.subr.mxu0 0.0
        %v362 = vand.u32 %v187, 4294901760
        %v363 = vsub.f32 %v187, %v362
        %v364 = vand.u32 %v363, 4294901760
        %v365 = vsub.f32 %v363, %v364
        %v366 = vand.u32 %v365, 4294901760
        %367 = vmatpush1.msra.mxu0 %v366
        %368 = vmatprep.subr.mxu0 0.0
        %v369 = vand.u32 %v186, 4294901760
        %v370 = vsub.f32 %v186, %v369
        %v371 = vand.u32 %v370, 4294901760
        %v372 = vsub.f32 %v370, %v371
        %v373 = vand.u32 %v372, 4294901760
        %374 = vmatpush1.msra.mxu0 %v373
        %375 = vmatprep.subr.mxu0 0.0
        %v376 = vand.u32 %v185, 4294901760
        %v377 = vsub.f32 %v185, %v376
        %v378 = vand.u32 %v377, 4294901760
        %v379 = vsub.f32 %v377, %v378
        %v380 = vand.u32 %v379, 4294901760
        %381 = vmatpush1.msra.mxu0 %v380
        %382 = vmatprep.subr.mxu0 0.0
        %v383 = vand.u32 %v184, 4294901760
        %v384 = vsub.f32 %v184, %v383
        %v385 = vand.u32 %v384, 4294901760
        %v386 = vsub.f32 %v384, %v385
        %v387 = vand.u32 %v386, 4294901760
        %388 = vmatpush1.msra.mxu0 %v387
        %389 = vmatprep.subr.mxu0 0.0
        %v390 = vand.u32 %v183, 4294901760
        %v391 = vsub.f32 %v183, %v390
        %v392 = vand.u32 %v391, 4294901760
        %v393 = vsub.f32 %v391, %v392
        %v394 = vand.u32 %v393, 4294901760
        %395 = vmatpush1.msra.mxu0 %v394
        %396 = vmatprep.subr.mxu0 0.0
        %v397 = vand.u32 %v182, 4294901760
        %v398 = vsub.f32 %v182, %v397
        %v399 = vand.u32 %v398, 4294901760
        %v400 = vsub.f32 %v398, %v399
        %v401 = vand.u32 %v400, 4294901760
        %402 = vmatpush1.msra.mxu0 %v401
        %403 = vmatprep.subr.mxu0 0.0
        %v404 = vand.u32 %v181, 4294901760
        %v405 = vsub.f32 %v181, %v404
        %v406 = vand.u32 %v405, 4294901760
        %v407 = vsub.f32 %v405, %v406
        %v408 = vand.u32 %v407, 4294901760
        %409 = vmatpush1.msra.mxu0 %v408
        %410 = vmatprep.subr.mxu0 0.0
        %411 = vmatpush2.msra.mxu0 0.0
        %412 = vmatprep.subr.mxu0 0.0
        %413 = vmatpush2.msra.mxu0 0.0
        %414 = vmatprep.subr.mxu0 0.0
        %415 = vmatpush2.msra.mxu0 0.0
        %416 = vmatprep.subr.mxu0 0.0
        %417 = vmatpush2.msra.mxu0 0.0
        %418 = vmatprep.subr.mxu0 0.0
        %419 = vmatpush2.msra.mxu0 0.0
        %420 = vmatprep.subr.mxu0 0.0
        %421 = vmatpush2.msra.mxu0 0.0
        %422 = vmatprep.subr.mxu0 0.0
        %423 = vmatpush2.msra.mxu0 0.0
        %424 = vmatprep.subr.mxu0 0.0
        %425 = vmatpush2.msra.mxu0 0.0
        %426 = vmatprep.subr.mxu0 0.0
        %427 = vmatpush2.msra.mxu0 0.0
        %428 = vmatprep.subr.mxu0 0.0
        %429 = vmatpush2.msra.mxu0 0.0
        %430 = vmatprep.subr.mxu0 0.0
        %431 = vmatpush2.msra.mxu0 0.0
        %432 = vmatprep.subr.mxu0 0.0
        %433 = vmatpush2.msra.mxu0 0.0
        %434 = vmatprep.subr.mxu0 0.0
        %435 = vmatpush2.msra.mxu0 0.0
        %436 = vmatprep.subr.mxu0 0.0
        %437 = vmatpush2.msra.mxu0 0.0
        %438 = vmatprep.subr.mxu0 0.0
        %439 = vmatpush2.msra.mxu0 0.0
        %440 = vmatprep.subr.mxu0 0.0
        %441 = vmatpush2.msra.mxu0 0.0
        %442 = vmatprep.mubr.f32.mxu0 0.0
        %v443 = vand.u32 %v179, 4294901760
        %444 = vmatmul.mubr.f32.gmra.mxu0 %v443
        %v445 = vpop.f32.mrf.mxu0
        %v446 = vadd.f32 %v285, %v445
        %v447 = vpop.f32.mrf.mxu0
        %448 = vmatprep.mubr.f32.mxu0 0.0
        %v449 = vand.u32 %v180, 4294901760
        %450 = vmatmul.mubr.f32.gmra.mxu0 %v449
        %v451 = vpop.f32.mrf.mxu0
        %v452 = vadd.f32 %v295, %v451
        %v453 = vpop.f32.mrf.mxu0
        %454 = vdwg.mxu0
        %455 = vmatprep.subr.mxu0 0.0
        %v456 = vand.u32 %v196, 4294901760
        %v457 = vsub.f32 %v196, %v456
        %458 = vmatpush1.msra.mxu0 %v457
        %459 = vmatprep.subr.mxu0 0.0
        %v460 = vand.u32 %v195, 4294901760
        %v461 = vsub.f32 %v195, %v460
        %462 = vmatpush1.msra.mxu0 %v461
        %463 = vmatprep.subr.mxu0 0.0
        %v464 = vand.u32 %v194, 4294901760
        %v465 = vsub.f32 %v194, %v464
        %466 = vmatpush1.msra.mxu0 %v465
        %467 = vmatprep.subr.mxu0 0.0
        %v468 = vand.u32 %v193, 4294901760
        %v469 = vsub.f32 %v193, %v468
        %470 = vmatpush1.msra.mxu0 %v469
        %471 = vmatprep.subr.mxu0 0.0
        %v472 = vand.u32 %v192, 4294901760
        %v473 = vsub.f32 %v192, %v472
        %474 = vmatpush1.msra.mxu0 %v473
        %475 = vmatprep.subr.mxu0 0.0
        %v476 = vand.u32 %v191, 4294901760
        %v477 = vsub.f32 %v191, %v476
        %478 = vmatpush1.msra.mxu0 %v477
        %479 = vmatprep.subr.mxu0 0.0
        %v480 = vand.u32 %v190, 4294901760
        %v481 = vsub.f32 %v190, %v480
        %482 = vmatpush1.msra.mxu0 %v481
        %483 = vmatprep.subr.mxu0 0.0
        %v484 = vand.u32 %v189, 4294901760
        %v485 = vsub.f32 %v189, %v484
        %486 = vmatpush1.msra.mxu0 %v485
        %487 = vmatprep.subr.mxu0 0.0
        %v488 = vand.u32 %v188, 4294901760
        %v489 = vsub.f32 %v188, %v488
        %490 = vmatpush1.msra.mxu0 %v489
        %491 = vmatprep.subr.mxu0 0.0
        %v492 = vand.u32 %v187, 4294901760
        %v493 = vsub.f32 %v187, %v492
        %494 = vmatpush1.msra.mxu0 %v493
        %495 = vmatprep.subr.mxu0 0.0
        %v496 = vand.u32 %v186, 4294901760
        %v497 = vsub.f32 %v186, %v496
        %498 = vmatpush1.msra.mxu0 %v497
        %499 = vmatprep.subr.mxu0 0.0
        %v500 = vand.u32 %v185, 4294901760
        %v501 = vsub.f32 %v185, %v500
        %502 = vmatpush1.msra.mxu0 %v501
        %503 = vmatprep.subr.mxu0 0.0
        %v504 = vand.u32 %v184, 4294901760
        %v505 = vsub.f32 %v184, %v504
        %506 = vmatpush1.msra.mxu0 %v505
        %507 = vmatprep.subr.mxu0 0.0
        %v508 = vand.u32 %v183, 4294901760
        %v509 = vsub.f32 %v183, %v508
        %510 = vmatpush1.msra.mxu0 %v509
        %511 = vmatprep.subr.mxu0 0.0
        %v512 = vand.u32 %v182, 4294901760
        %v513 = vsub.f32 %v182, %v512
        %514 = vmatpush1.msra.mxu0 %v513
        %515 = vmatprep.subr.mxu0 0.0
        %v516 = vand.u32 %v181, 4294901760
        %v517 = vsub.f32 %v181, %v516
        %518 = vmatpush1.msra.mxu0 %v517
        %519 = vmatprep.subr.mxu0 0.0
        %520 = vmatpush2.msra.mxu0 0.0
        %521 = vmatprep.subr.mxu0 0.0
        %522 = vmatpush2.msra.mxu0 0.0
        %523 = vmatprep.subr.mxu0 0.0
        %524 = vmatpush2.msra.mxu0 0.0
        %525 = vmatprep.subr.mxu0 0.0
        %526 = vmatpush2.msra.mxu0 0.0
        %527 = vmatprep.subr.mxu0 0.0
        %528 = vmatpush2.msra.mxu0 0.0
        %529 = vmatprep.subr.mxu0 0.0
        %530 = vmatpush2.msra.mxu0 0.0
        %531 = vmatprep.subr.mxu0 0.0
        %532 = vmatpush2.msra.mxu0 0.0
        %533 = vmatprep.subr.mxu0 0.0
        %534 = vmatpush2.msra.mxu0 0.0
        %535 = vmatprep.subr.mxu0 0.0
        %536 = vmatpush2.msra.mxu0 0.0
        %537 = vmatprep.subr.mxu0 0.0
        %538 = vmatpush2.msra.mxu0 0.0
        %539 = vmatprep.subr.mxu0 0.0
        %540 = vmatpush2.msra.mxu0 0.0
        %541 = vmatprep.subr.mxu0 0.0
        %542 = vmatpush2.msra.mxu0 0.0
        %543 = vmatprep.subr.mxu0 0.0
        %544 = vmatpush2.msra.mxu0 0.0
        %545 = vmatprep.subr.mxu0 0.0
        %546 = vmatpush2.msra.mxu0 0.0
        %547 = vmatprep.subr.mxu0 0.0
        %548 = vmatpush2.msra.mxu0 0.0
        %549 = vmatprep.subr.mxu0 0.0
        %550 = vmatpush2.msra.mxu0 0.0
        %551 = vmatprep.mubr.f32.mxu0 0.0
        %v552 = vand.u32 %v179, 4294901760
        %v553 = vsub.f32 %v179, %v552
        %554 = vmatmul.mubr.f32.gmra.mxu0 %v553
        %v555 = vpop.f32.mrf.mxu0
        %v556 = vadd.f32 %v446, %v555
        %v557 = vpop.f32.mrf.mxu0
        %558 = vmatprep.mubr.f32.mxu0 0.0
        %v559 = vand.u32 %v180, 4294901760
        %v560 = vsub.f32 %v180, %v559
        %561 = vmatmul.mubr.f32.gmra.mxu0 %v560
        %v562 = vpop.f32.mrf.mxu0
        %v563 = vadd.f32 %v452, %v562
        %v564 = vpop.f32.mrf.mxu0
        %565 = vdwg.mxu0
        %566 = vmatprep.subr.mxu0 0.0
        %v567 = vand.u32 %v196, 4294901760
        %568 = vmatpush1.msra.mxu0 %v567
        %569 = vmatprep.subr.mxu0 0.0
        %v570 = vand.u32 %v195, 4294901760
        %571 = vmatpush1.msra.mxu0 %v570
        %572 = vmatprep.subr.mxu0 0.0
        %v573 = vand.u32 %v194, 4294901760
        %574 = vmatpush1.msra.mxu0 %v573
        %575 = vmatprep.subr.mxu0 0.0
        %v576 = vand.u32 %v193, 4294901760
        %577 = vmatpush1.msra.mxu0 %v576
        %578 = vmatprep.subr.mxu0 0.0
        %v579 = vand.u32 %v192, 4294901760
        %580 = vmatpush1.msra.mxu0 %v579
        %581 = vmatprep.subr.mxu0 0.0
        %v582 = vand.u32 %v191, 4294901760
        %583 = vmatpush1.msra.mxu0 %v582
        %584 = vmatprep.subr.mxu0 0.0
        %v585 = vand.u32 %v190, 4294901760
        %586 = vmatpush1.msra.mxu0 %v585
        %587 = vmatprep.subr.mxu0 0.0
        %v588 = vand.u32 %v189, 4294901760
        %589 = vmatpush1.msra.mxu0 %v588
        %590 = vmatprep.subr.mxu0 0.0
        %v591 = vand.u32 %v188, 4294901760
        %592 = vmatpush1.msra.mxu0 %v591
        %593 = vmatprep.subr.mxu0 0.0
        %v594 = vand.u32 %v187, 4294901760
        %595 = vmatpush1.msra.mxu0 %v594
        %596 = vmatprep.subr.mxu0 0.0
        %v597 = vand.u32 %v186, 4294901760
        %598 = vmatpush1.msra.mxu0 %v597
        %599 = vmatprep.subr.mxu0 0.0
        %v600 = vand.u32 %v185, 4294901760
        %601 = vmatpush1.msra.mxu0 %v600
        %602 = vmatprep.subr.mxu0 0.0
        %v603 = vand.u32 %v184, 4294901760
        %604 = vmatpush1.msra.mxu0 %v603
        %605 = vmatprep.subr.mxu0 0.0
        %v606 = vand.u32 %v183, 4294901760
        %607 = vmatpush1.msra.mxu0 %v606
        %608 = vmatprep.subr.mxu0 0.0
        %v609 = vand.u32 %v182, 4294901760
        %610 = vmatpush1.msra.mxu0 %v609
        %611 = vmatprep.subr.mxu0 0.0
        %v612 = vand.u32 %v181, 4294901760
        %613 = vmatpush1.msra.mxu0 %v612
        %614 = vmatprep.subr.mxu0 0.0
        %615 = vmatpush2.msra.mxu0 0.0
        %616 = vmatprep.subr.mxu0 0.0
        %617 = vmatpush2.msra.mxu0 0.0
        %618 = vmatprep.subr.mxu0 0.0
        %619 = vmatpush2.msra.mxu0 0.0
        %620 = vmatprep.subr.mxu0 0.0
        %621 = vmatpush2.msra.mxu0 0.0
        %622 = vmatprep.subr.mxu0 0.0
        %623 = vmatpush2.msra.mxu0 0.0
        %624 = vmatprep.subr.mxu0 0.0
        %625 = vmatpush2.msra.mxu0 0.0
        %626 = vmatprep.subr.mxu0 0.0
        %627 = vmatpush2.msra.mxu0 0.0
        %628 = vmatprep.subr.mxu0 0.0
        %629 = vmatpush2.msra.mxu0 0.0
        %630 = vmatprep.subr.mxu0 0.0
        %631 = vmatpush2.msra.mxu0 0.0
        %632 = vmatprep.subr.mxu0 0.0
        %633 = vmatpush2.msra.mxu0 0.0
        %634 = vmatprep.subr.mxu0 0.0
        %635 = vmatpush2.msra.mxu0 0.0
        %636 = vmatprep.subr.mxu0 0.0
        %637 = vmatpush2.msra.mxu0 0.0
        %638 = vmatprep.subr.mxu0 0.0
        %639 = vmatpush2.msra.mxu0 0.0
        %640 = vmatprep.subr.mxu0 0.0
        %641 = vmatpush2.msra.mxu0 0.0
        %642 = vmatprep.subr.mxu0 0.0
        %643 = vmatpush2.msra.mxu0 0.0
        %644 = vmatprep.subr.mxu0 0.0
        %645 = vmatpush2.msra.mxu0 0.0
        %646 = vmatprep.mubr.f32.mxu0 0.0
        %v647 = vand.u32 %v179, 4294901760
        %v648 = vsub.f32 %v179, %v647
        %v649 = vand.u32 %v648, 4294901760
        %650 = vmatmul.mubr.f32.gmra.mxu0 %v649
        %v651 = vpop.f32.mrf.mxu0
        %v652 = vadd.f32 %v556, %v651
        %v653 = vpop.f32.mrf.mxu0
        %654 = vmatprep.mubr.f32.mxu0 0.0
        %v655 = vand.u32 %v180, 4294901760
        %v656 = vsub.f32 %v180, %v655
        %v657 = vand.u32 %v656, 4294901760
        %658 = vmatmul.mubr.f32.gmra.mxu0 %v657
        %v659 = vpop.f32.mrf.mxu0
        %v660 = vadd.f32 %v563, %v659
        %v661 = vpop.f32.mrf.mxu0
        %662 = vdwg.mxu0
        %663 = vmatprep.subr.mxu0 0.0
        %v664 = vand.u32 %v196, 4294901760
        %v665 = vsub.f32 %v196, %v664
        %v666 = vand.u32 %v665, 4294901760
        %667 = vmatpush1.msra.mxu0 %v666
        %668 = vmatprep.subr.mxu0 0.0
        %v669 = vand.u32 %v195, 4294901760
        %v670 = vsub.f32 %v195, %v669
        %v671 = vand.u32 %v670, 4294901760
        %672 = vmatpush1.msra.mxu0 %v671
        %673 = vmatprep.subr.mxu0 0.0
        %v674 = vand.u32 %v194, 4294901760
        %v675 = vsub.f32 %v194, %v674
        %v676 = vand.u32 %v675, 4294901760
        %677 = vmatpush1.msra.mxu0 %v676
        %678 = vmatprep.subr.mxu0 0.0
        %v679 = vand.u32 %v193, 4294901760
        %v680 = vsub.f32 %v193, %v679
        %v681 = vand.u32 %v680, 4294901760
        %682 = vmatpush1.msra.mxu0 %v681
        %683 = vmatprep.subr.mxu0 0.0
        %v684 = vand.u32 %v192, 4294901760
        %v685 = vsub.f32 %v192, %v684
        %v686 = vand.u32 %v685, 4294901760
        %687 = vmatpush1.msra.mxu0 %v686
        %688 = vmatprep.subr.mxu0 0.0
        %v689 = vand.u32 %v191, 4294901760
        %v690 = vsub.f32 %v191, %v689
        %v691 = vand.u32 %v690, 4294901760
        %692 = vmatpush1.msra.mxu0 %v691
        %693 = vmatprep.subr.mxu0 0.0
        %v694 = vand.u32 %v190, 4294901760
        %v695 = vsub.f32 %v190, %v694
        %v696 = vand.u32 %v695, 4294901760
        %697 = vmatpush1.msra.mxu0 %v696
        %698 = vmatprep.subr.mxu0 0.0
        %v699 = vand.u32 %v189, 4294901760
        %v700 = vsub.f32 %v189, %v699
        %v701 = vand.u32 %v700, 4294901760
        %702 = vmatpush1.msra.mxu0 %v701
        %703 = vmatprep.subr.mxu0 0.0
        %v704 = vand.u32 %v188, 4294901760
        %v705 = vsub.f32 %v188, %v704
        %v706 = vand.u32 %v705, 4294901760
        %707 = vmatpush1.msra.mxu0 %v706
        %708 = vmatprep.subr.mxu0 0.0
        %v709 = vand.u32 %v187, 4294901760
        %v710 = vsub.f32 %v187, %v709
        %v711 = vand.u32 %v710, 4294901760
        %712 = vmatpush1.msra.mxu0 %v711
        %713 = vmatprep.subr.mxu0 0.0
        %v714 = vand.u32 %v186, 4294901760
        %v715 = vsub.f32 %v186, %v714
        %v716 = vand.u32 %v715, 4294901760
        %717 = vmatpush1.msra.mxu0 %v716
        %718 = vmatprep.subr.mxu0 0.0
        %v719 = vand.u32 %v185, 4294901760
        %v720 = vsub.f32 %v185, %v719
        %v721 = vand.u32 %v720, 4294901760
        %722 = vmatpush1.msra.mxu0 %v721
        %723 = vmatprep.subr.mxu0 0.0
        %v724 = vand.u32 %v184, 4294901760
        %v725 = vsub.f32 %v184, %v724
        %v726 = vand.u32 %v725, 4294901760
        %727 = vmatpush1.msra.mxu0 %v726
        %728 = vmatprep.subr.mxu0 0.0
        %v729 = vand.u32 %v183, 4294901760
        %v730 = vsub.f32 %v183, %v729
        %v731 = vand.u32 %v730, 4294901760
        %732 = vmatpush1.msra.mxu0 %v731
        %733 = vmatprep.subr.mxu0 0.0
        %v734 = vand.u32 %v182, 4294901760
        %v735 = vsub.f32 %v182, %v734
        %v736 = vand.u32 %v735, 4294901760
        %737 = vmatpush1.msra.mxu0 %v736
        %738 = vmatprep.subr.mxu0 0.0
        %v739 = vand.u32 %v181, 4294901760
        %v740 = vsub.f32 %v181, %v739
        %v741 = vand.u32 %v740, 4294901760
        %742 = vmatpush1.msra.mxu0 %v741
        %743 = vmatprep.subr.mxu0 0.0
        %744 = vmatpush2.msra.mxu0 0.0
        %745 = vmatprep.subr.mxu0 0.0
        %746 = vmatpush2.msra.mxu0 0.0
        %747 = vmatprep.subr.mxu0 0.0
        %748 = vmatpush2.msra.mxu0 0.0
        %749 = vmatprep.subr.mxu0 0.0
        %750 = vmatpush2.msra.mxu0 0.0
        %751 = vmatprep.subr.mxu0 0.0
        %752 = vmatpush2.msra.mxu0 0.0
        %753 = vmatprep.subr.mxu0 0.0
        %754 = vmatpush2.msra.mxu0 0.0
        %755 = vmatprep.subr.mxu0 0.0
        %756 = vmatpush2.msra.mxu0 0.0
        %757 = vmatprep.subr.mxu0 0.0
        %758 = vmatpush2.msra.mxu0 0.0
        %759 = vmatprep.subr.mxu0 0.0
        %760 = vmatpush2.msra.mxu0 0.0
        %761 = vmatprep.subr.mxu0 0.0
        %762 = vmatpush2.msra.mxu0 0.0
        %763 = vmatprep.subr.mxu0 0.0
        %764 = vmatpush2.msra.mxu0 0.0
        %765 = vmatprep.subr.mxu0 0.0
        %766 = vmatpush2.msra.mxu0 0.0
        %767 = vmatprep.subr.mxu0 0.0
        %768 = vmatpush2.msra.mxu0 0.0
        %769 = vmatprep.subr.mxu0 0.0
        %770 = vmatpush2.msra.mxu0 0.0
        %771 = vmatprep.subr.mxu0 0.0
        %772 = vmatpush2.msra.mxu0 0.0
        %773 = vmatprep.subr.mxu0 0.0
        %774 = vmatpush2.msra.mxu0 0.0
        %775 = vmatprep.mubr.f32.mxu0 0.0
        %v776 = vand.u32 %v179, 4294901760
        %777 = vmatmul.mubr.f32.gmra.mxu0 %v776
        %v778 = vpop.f32.mrf.mxu0
        %v779 = vadd.f32 %v652, %v778
        %v780 = vpop.f32.mrf.mxu0
        %781 = vmatprep.mubr.f32.mxu0 0.0
        %v782 = vand.u32 %v180, 4294901760
        %783 = vmatmul.mubr.f32.gmra.mxu0 %v782
        %v784 = vpop.f32.mrf.mxu0
        %v785 = vadd.f32 %v660, %v784
        %v786 = vpop.f32.mrf.mxu0
        %787 = vdwg.mxu0
        %788 = vmatprep.subr.mxu0 0.0
        %v789 = vand.u32 %v196, 4294901760
        %790 = vmatpush1.msra.mxu0 %v789
        %791 = vmatprep.subr.mxu0 0.0
        %v792 = vand.u32 %v195, 4294901760
        %793 = vmatpush1.msra.mxu0 %v792
        %794 = vmatprep.subr.mxu0 0.0
        %v795 = vand.u32 %v194, 4294901760
        %796 = vmatpush1.msra.mxu0 %v795
        %797 = vmatprep.subr.mxu0 0.0
        %v798 = vand.u32 %v193, 4294901760
        %799 = vmatpush1.msra.mxu0 %v798
        %800 = vmatprep.subr.mxu0 0.0
        %v801 = vand.u32 %v192, 4294901760
        %802 = vmatpush1.msra.mxu0 %v801
        %803 = vmatprep.subr.mxu0 0.0
        %v804 = vand.u32 %v191, 4294901760
        %805 = vmatpush1.msra.mxu0 %v804
        %806 = vmatprep.subr.mxu0 0.0
        %v807 = vand.u32 %v190, 4294901760
        %808 = vmatpush1.msra.mxu0 %v807
        %809 = vmatprep.subr.mxu0 0.0
        %v810 = vand.u32 %v189, 4294901760
        %811 = vmatpush1.msra.mxu0 %v810
        %812 = vmatprep.subr.mxu0 0.0
        %v813 = vand.u32 %v188, 4294901760
        %814 = vmatpush1.msra.mxu0 %v813
        %815 = vmatprep.subr.mxu0 0.0
        %v816 = vand.u32 %v187, 4294901760
        %817 = vmatpush1.msra.mxu0 %v816
        %818 = vmatprep.subr.mxu0 0.0
        %v819 = vand.u32 %v186, 4294901760
        %820 = vmatpush1.msra.mxu0 %v819
        %821 = vmatprep.subr.mxu0 0.0
        %v822 = vand.u32 %v185, 4294901760
        %823 = vmatpush1.msra.mxu0 %v822
        %824 = vmatprep.subr.mxu0 0.0
        %v825 = vand.u32 %v184, 4294901760
        %826 = vmatpush1.msra.mxu0 %v825
        %827 = vmatprep.subr.mxu0 0.0
        %v828 = vand.u32 %v183, 4294901760
        %829 = vmatpush1.msra.mxu0 %v828
        %830 = vmatprep.subr.mxu0 0.0
        %v831 = vand.u32 %v182, 4294901760
        %832 = vmatpush1.msra.mxu0 %v831
        %833 = vmatprep.subr.mxu0 0.0
        %v834 = vand.u32 %v181, 4294901760
        %835 = vmatpush1.msra.mxu0 %v834
        %836 = vmatprep.subr.mxu0 0.0
        %837 = vmatpush2.msra.mxu0 0.0
        %838 = vmatprep.subr.mxu0 0.0
        %839 = vmatpush2.msra.mxu0 0.0
        %840 = vmatprep.subr.mxu0 0.0
        %841 = vmatpush2.msra.mxu0 0.0
        %842 = vmatprep.subr.mxu0 0.0
        %843 = vmatpush2.msra.mxu0 0.0
        %844 = vmatprep.subr.mxu0 0.0
        %845 = vmatpush2.msra.mxu0 0.0
        %846 = vmatprep.subr.mxu0 0.0
        %847 = vmatpush2.msra.mxu0 0.0
        %848 = vmatprep.subr.mxu0 0.0
        %849 = vmatpush2.msra.mxu0 0.0
        %850 = vmatprep.subr.mxu0 0.0
        %851 = vmatpush2.msra.mxu0 0.0
        %852 = vmatprep.subr.mxu0 0.0
        %853 = vmatpush2.msra.mxu0 0.0
        %854 = vmatprep.subr.mxu0 0.0
        %855 = vmatpush2.msra.mxu0 0.0
        %856 = vmatprep.subr.mxu0 0.0
        %857 = vmatpush2.msra.mxu0 0.0
        %858 = vmatprep.subr.mxu0 0.0
        %859 = vmatpush2.msra.mxu0 0.0
        %860 = vmatprep.subr.mxu0 0.0
        %861 = vmatpush2.msra.mxu0 0.0
        %862 = vmatprep.subr.mxu0 0.0
        %863 = vmatpush2.msra.mxu0 0.0
        %864 = vmatprep.subr.mxu0 0.0
        %865 = vmatpush2.msra.mxu0 0.0
        %866 = vmatprep.subr.mxu0 0.0
        %867 = vmatpush2.msra.mxu0 0.0
        %868 = vmatprep.mubr.f32.mxu0 0.0
        %v869 = vand.u32 %v179, 4294901760
        %870 = vmatmul.mubr.f32.gmra.mxu0 %v869
        %v871 = vpop.f32.mrf.mxu0
        %v872 = vadd.f32 %v779, %v871
        %v873 = vpop.f32.mrf.mxu0
        %874 = vmatprep.mubr.f32.mxu0 0.0
        %v875 = vand.u32 %v180, 4294901760
        %876 = vmatmul.mubr.f32.gmra.mxu0 %v875
        %v877 = vpop.f32.mrf.mxu0
        %v878 = vadd.f32 %v785, %v877
        %v879 = vpop.f32.mrf.mxu0
        %880 = vdwg.mxu0
        %881 = vst [vmem:[%s176] sm:$0xff] %v872
        %882 = vst [vmem:[%s176 + $0x8] sm:$0xff] %v878
        %s883 = sand.u32 %s75, 1
        %s884 = scalar_lea.sflag [#allocation4], %s883
        %s885 = sand.u32 %s75, 1
        %s886 = smul.addr %s885, 16
        %s887 = scalar_lea.vmem [#allocation7], %s886
        // Predicated region
        $region37: #{tpu_custom_call.1} parent=27 // pred_check
          %p888 = pneg %p85
        $region38: #{tpu_custom_call.1} parent=27 // pred_check_branch
          %890 = sbr.rel (%p888) target = $region40
        $region39: #{tpu_custom_call.1} parent=27 // pred_region
          %s891 = smul.u32 2, %s20
          %s893 = ssub.s32 256, 256
          %894 = vsyncadd %s884, %s893
          %s895 = smul.addr %s891, 128
          %s896 = scalar_lea.hbm %s2, %s895
          %s897 = sshll.u32 %s887, 4
          %s898 = int_to_ptr.vmem [resolvable:$true] %s897
          %903 = dma.vmem_to_hbm [thread:$0]  %s898, 256, %s896, %s884, 128, 128, 8
        $region40: #{tpu_custom_call.1} parent=27 // pred_fallthru
          _
      $region28: #{tpu_custom_call.1} parent=5 // pred_fallthru
        _
      %p904 = scmp.le.s32.totalorder 2, %s15
      // Predicated region
      $region41: #{tpu_custom_call.1} parent=5 // pred_check
        %p905 = pneg %p904
      $region42: #{tpu_custom_call.1} parent=5 // pred_check_branch
        %907 = sbr.rel (%p905) target = $region44
      $region43: #{tpu_custom_call.1} parent=5 // pred_region
        %s908 = ssub.s32 %s15, 2
        // Predicated region
        $region45: #{tpu_custom_call.1} parent=43 // pred_check
          %p909 = pneg %p91
        $region46: #{tpu_custom_call.1} parent=43 // pred_check_branch
          %911 = sbr.rel (%p909) target = $region48
        $region47: #{tpu_custom_call.1} parent=43 // pred_region
          %s912 = sand.u32 %s76, 1
          %s913 = scalar_lea.sflag [#allocation4], %s912
          %s914 = sand.u32 %s76, 1
          %s915 = smul.addr %s914, 16
          %s916 = scalar_lea.vmem [#allocation7], %s915
          %917 = dma.done %s913, 256
        $region48: #{tpu_custom_call.1} parent=43 // pred_fallthru
          _
      $region44: #{tpu_custom_call.1} parent=5 // pred_fallthru
        _
    $region6: #{tpu_custom_call.1} parent=1 // loop_footer
      %s19 = sadd.s32 1, %s15
    $region7: #{tpu_custom_call.1} parent=1 // loop_footer_branch
      %14 = sbr.rel target = $region3
    $region8: #{tpu_custom_call.1} parent=1 // loop_exit
      _
    %918 = vsyncpa [#allocation3], 1
    %s919 = scalar_lea.sflag [#allocation3], 1
    %920 = vsyncpa %s919, 1
    %921 = vsyncpa [#allocation6], 1
    %922 = vsyncpa [#allocation4], 1
    %s923 = scalar_lea.sflag [#allocation4], 1
    %924 = vsyncpa %s923, 1

</llo_original>
